<compile_context>
chip_gen: v5e
topology: v5e:2x2
jax: 0.10.0
libtpu: 0.0.40
codegen_flags: <defaults>
</compile_context>

<pallas_src>
import jax
import jax.numpy as jnp
from jax.experimental import pallas as pl
from jax.experimental.pallas import tpu as pltpu


# ---------------------------------------------------------------------------
# Scalar (0-D) path: SMEM-resident, pure scalar-unit add.
# ---------------------------------------------------------------------------
def _add_one_scalar_kernel(x_ref, o_ref):
    o_ref[0, 0] = x_ref[0, 0] + jnp.asarray(1, dtype=o_ref.dtype)


def _add_one_scalar(x):
    x2d = x.reshape(1, 1)
    out = pl.pallas_call(
        _add_one_scalar_kernel,
        out_shape=jax.ShapeDtypeStruct((1, 1), x.dtype),
        in_specs=[pl.BlockSpec(memory_space=pltpu.MemorySpace.SMEM)],
        out_specs=pl.BlockSpec(memory_space=pltpu.MemorySpace.SMEM),
    )(x2d)
    return out.reshape(())


# ---------------------------------------------------------------------------
# Tensor path: lane-dense (<=512, lanes) tiles, parallel grid over row blocks.
# ---------------------------------------------------------------------------
_BLK_ROWS = 512                          # multiple of 32: native for f32/bf16/int8
_LANE_CHOICES = (1024, 512, 256, 128)    # large multiples of 128 (lane width)


def _add_one_tile_kernel(x_ref, o_ref):
    # Elementwise VPU add on a full lane-dense tile.
    o_ref[...] = x_ref[...] + jnp.asarray(1, dtype=o_ref.dtype)


def _round_up(a, b):
    return ((a + b - 1) // b) * b


def _run_tiled_2d(x2d):
    """Run the +1 kernel on a 2-D array whose last dim is a multiple of 128."""
    rows, lanes = x2d.shape
    # Either a block equal to the full (small) row extent, or a multiple-of-32
    # row block; the ragged last block is masked by Pallas (safe: elementwise).
    blk_rows = rows if rows <= _BLK_ROWS else _BLK_ROWS
    grid = (pl.cdiv(rows, blk_rows),)
    n = x2d.size
    itemsize = jnp.dtype(x2d.dtype).itemsize
    return pl.pallas_call(
        _add_one_tile_kernel,
        out_shape=jax.ShapeDtypeStruct(x2d.shape, x2d.dtype),
        grid=grid,
        in_specs=[pl.BlockSpec((blk_rows, lanes), lambda i: (i, 0))],
        out_specs=pl.BlockSpec((blk_rows, lanes), lambda i: (i, 0)),
        compiler_params=pltpu.CompilerParams(
            dimension_semantics=("parallel",)),
        cost_estimate=pl.CostEstimate(
            flops=n, transcendentals=0, bytes_accessed=2 * n * itemsize),
    )(x2d)


def _add_one_tensor(x):
    orig_shape = x.shape
    n = x.size
    if n == 0:
        return x

    # Pick the widest lane count that divides the element count: the reshape
    # to (-1, lanes) is a free bitcast (row-major order unchanged), so there
    # is no extra HBM traffic beyond the ideal read-n / write-n.
    for lanes in _LANE_CHOICES:
        if n % lanes == 0:
            out2d = _run_tiled_2d(x.reshape(-1, lanes))
            return out2d.reshape(orig_shape)

    # Fallback for ragged element counts (not a multiple of 128): pad to a
    # lane-dense slab, compute, slice back.  Only hit for small/odd shapes.
    lanes = 128
    n_pad = _round_up(n, lanes)
    flat = jnp.pad(x.reshape(-1), (0, n_pad - n))
    out2d = _run_tiled_2d(flat.reshape(n_pad // lanes, lanes))
    return out2d.reshape(-1)[:n].reshape(orig_shape)


# ---------------------------------------------------------------------------
# Public wrapper: MyModule.forward(input) = input + 1
# ---------------------------------------------------------------------------
def my_module_forward(x):
    """Equivalent of MyModule.forward(input) = input + 1 (dtype-preserving)."""
    x = jnp.asarray(x)
    if x.ndim == 0:
        return _add_one_scalar(x)
    return _add_one_tensor(x)


if __name__ == "__main__":
    # Scalar case matching the module spec: x = torch.tensor(1.0)
    x_scalar = jnp.asarray(1.0, dtype=jnp.float32)
    out_scalar = my_module_forward(x_scalar)
    jax.block_until_ready(out_scalar)
    assert jnp.allclose(out_scalar, x_scalar + 1.0), (out_scalar, x_scalar + 1.0)

    # Small batched case exercising the lane-dense tiled path (2048 elems).
    key = jax.random.PRNGKey(0)
    x_batch = jax.random.normal(key, (2, 4, 16, 16), dtype=jnp.float32)
    out_batch = my_module_forward(x_batch)
    jax.block_until_ready(out_batch)
    assert jnp.allclose(out_batch, x_batch + 1.0)

    # Ragged size exercising the (rare) pad fallback path.
    x_ragged = jax.random.normal(jax.random.PRNGKey(1), (3, 5, 7),
                                 dtype=jnp.float32)
    out_ragged = my_module_forward(x_ragged)
    jax.block_until_ready(out_ragged)
    assert jnp.allclose(out_ragged, x_ragged + 1.0)

    print("KERNEL_OK")
</pallas_src>

<mosaic_0001>
module attributes {stable_mosaic.version = 11 : i64} {
  func.func @_add_one_scalar_kernel(%arg0: memref<1x1xf32, #tpu.memory_space<smem>>, %arg1: memref<1x1xf32, #tpu.memory_space<smem>>) attributes {dimension_semantics = [], scalar_prefetch = 0 : i64, scratch_operands = 0 : i64, tpu.core_type = #tpu.core_type<tc>} {
    %c0 = arith.constant 0 : index
    %c0_0 = arith.constant 0 : index
    %0 = memref.load %arg0[%c0, %c0_0] : memref<1x1xf32, #tpu.memory_space<smem>>
    %cst = arith.constant 1.000000e+00 : f32
    %1 = arith.addf %0, %cst : f32
    %c0_1 = arith.constant 0 : index
    %c0_2 = arith.constant 0 : index
    %2 = memref.load %arg1[%c0_1, %c0_2] : memref<1x1xf32, #tpu.memory_space<smem>>
    memref.store %1, %arg1[%c0_1, %c0_2] : memref<1x1xf32, #tpu.memory_space<smem>>
    return
  }
}

</mosaic_0001>

<llo_original>
// kernel: tpu_custom_call.1
$region0: #{tpu_custom_call.1}
  #allocation0 [shape = 'u32[]', space=smem, size = 0x4, offset = 0x4, fixed_abs, tag = 'smem constant byte address 0x4 - core index']
  #allocation1 [shape = 'u32[72,128]{1,0:T(1,128)}', space=vmem, size = 0x9000, scoped, tag = 'internal scratch']
  #allocation2 [shape = 'f32[1,1]{1,0:T(1,128)S(6)}', space=smem, size = 0x200, scoped, tag = 'scoped memory for tpu_custom_call.1']
  %s0 = inlined_call_operand.<no memory space> [shape: f32[1,1], index: 0, kind: input, shape index: {}]
  %s1 = inlined_call_operand.hbm [shape: f32[1,1], index: 1, kind: output, shape index: {}]
  %s2 = sld [smem:[#allocation0]]
  $region14: #{tpu_custom_call.1} parent=0
    _
  %s4 = ssub.s32 1, %s2
  %s5 = scalar_select 0, %s4, %s2
  %6 = sst [smem:[#allocation2]] %s0
  $region1: #{tpu_custom_call.1} parent=0
    #allocation3 [shape = 'u8[512]{0}', space=smem, size = 0x200, scoped, tag = 'output window, operand 0, single buffered']
    #allocation4 [shape = 's32[1]{0}', space=sflag, size = 0x4, scoped, tag = 'scoped memory for tpu_custom_call.1']
    %7 = vsyncpa [#allocation4], 0
    // Predicated region
    $region2: #{tpu_custom_call.1} parent=1 // pred_check
      _
    $region3: #{tpu_custom_call.1} parent=1 // pred_check_branch
      %9 = sbr.rel (0) target = $region5
    $region4: #{tpu_custom_call.1} parent=1 // pred_region
      _
    $region5: #{tpu_custom_call.1} parent=1 // pred_fallthru
      _
    %s10 = sld [smem:[#allocation2]]
    %s11 = sadd.f32 %s10, 1.0
    %s12 = scalar_lea.smem [#allocation3], 0
    %13 = sst [smem:[%s12]] %s11
    // Predicated region
    $region6: #{tpu_custom_call.1} parent=1 // pred_check
      _
    $region7: #{tpu_custom_call.1} parent=1 // pred_check_branch
      %15 = sbr.rel (0) target = $region9
    $region8: #{tpu_custom_call.1} parent=1 // pred_region
      %17 = vsyncadd [#allocation4], 0
      %s19 = sshll.u32 %s1, 4
      %s20 = int_to_ptr.hbm [resolvable:$true] %s19
      %22 = dma.smem_to_hbm [#allocation3], 16, %s20, [#allocation4]
    $region9: #{tpu_custom_call.1} parent=1 // pred_fallthru
      _
    // Predicated region
    $region10: #{tpu_custom_call.1} parent=1 // pred_check
      _
    $region11: #{tpu_custom_call.1} parent=1 // pred_check_branch
      %24 = sbr.rel (0) target = $region13
    $region12: #{tpu_custom_call.1} parent=1 // pred_region
      %26 = dma.done [#allocation4], 16
    $region13: #{tpu_custom_call.1} parent=1 // pred_fallthru
      _
    %27 = sfence
    %28 = vsyncpa [#allocation4], 1

</llo_original>
